<compile_context>
chip_gen: v5e
topology: v5e:2x2
jax: 0.10.0
libtpu: 0.0.40
codegen_flags: <defaults>
</compile_context>

<pallas_src>
import jax
import jax.numpy as jnp
import numpy as np
from jax.experimental import pallas as pl
from jax.experimental.pallas import tpu as pltpu


def _round_up(x, m):
    return ((x + m - 1) // m) * m


def _cdiv(a, b):
    return -(-a // b)


def mlp_kernel(x_ref, w1_ref, b1_ref, w2_ref, b2_ref, w3_ref, b3_ref, o_ref):
    """Fused forward for one batch tile: 2 matmuls + ReLU + VPU reduce + sigmoid."""
    x = x_ref[...]                                                   # (tb, D)

    h1 = jnp.dot(x, w1_ref[...], preferred_element_type=jnp.float32) + b1_ref[...]
    h1 = jnp.maximum(h1, 0.0)                                        # (tb, H)

    h2 = jnp.dot(h1, w2_ref[...], preferred_element_type=jnp.float32) + b2_ref[...]
    h2 = jnp.maximum(h2, 0.0)                                        # (tb, H)

    # Output layer: N=1 matmul -> VPU multiply + lane reduction (MXU stays idle
    # instead of burning a pass at 1/256 column utilization).
    logits = jnp.sum(h2 * w3_ref[...], axis=-1) + b3_ref[0]          # (tb,)

    # Lane-dense store: one (1, tb) row of the (1, B_pad) output slab.
    o_ref[...] = jax.nn.sigmoid(logits)[None, :]


def binary_classification_forward(x, w1, b1, w2, b2, w3, b3, *, tb=None):
    """x: (B, D) f32.  w1: (D, H), b1: (1, H), w2: (H, H), b2: (1, H),
    w3: (1, H)  (torch-native output-layer weight layout), b3: (1,).
    Returns sigmoid probabilities of shape (B, 1)."""
    B, D = x.shape
    H = w1.shape[1]

    # --- batch tile selection -------------------------------------------------
    if tb is None:
        if B <= 512:
            tb = _round_up(B, 8)                 # single tile; overhead-dominated anyway
        else:
            n = _cdiv(B, 512)                    # target 256-512 rows per tile
            tb = _round_up(_cdiv(B, n), 128)     # >=2 tiles -> both v7x TCs get work
    tb = max(8, _round_up(tb, 8))
    B_pad = _round_up(B, tb)
    n_tiles = B_pad // tb
    if n_tiles > 1 and tb % 128 != 0:
        # keep the lane-dense output block legal (last dim multiple of 128 or full)
        tb = _round_up(tb, 128)
        B_pad = _round_up(B, tb)
        n_tiles = B_pad // tb

    # Zero-pad the batch so padded rows are well-defined (they are sliced away).
    if B_pad != B:
        x = jnp.pad(x, ((0, B_pad - B), (0, 0)))

    # --- VMEM budget (double buffers counted), capped for v7x's 64 MiB -------
    f32 = 4
    vmem_est = f32 * (
        2 * tb * D            # x tile, double-buffered
        + 2 * (D * H + H)     # W1 + b1 (constant-index inputs are still double-buffered)
        + 2 * (H * H + H)     # W2 + b2
        + 2 * H               # w3 row
        + 2 * tb              # output row, double-buffered
        + 3 * tb * H          # h1 / h2 / elementwise temporaries
    )
    vmem_limit = int(min(max(2 * vmem_est, 8 * 1024 * 1024), 64 * 1024 * 1024))

    out = pl.pallas_call(
        mlp_kernel,
        out_shape=jax.ShapeDtypeStruct((1, B_pad), jnp.float32),
        grid=(n_tiles,),
        in_specs=[
            pl.BlockSpec((tb, D), lambda i: (i, 0)),   # x tile
            pl.BlockSpec((D, H), lambda i: (0, 0)),    # W1 (in, hidden)
            pl.BlockSpec((1, H), lambda i: (0, 0)),    # b1
            pl.BlockSpec((H, H), lambda i: (0, 0)),    # W2 (hidden, hidden)
            pl.BlockSpec((1, H), lambda i: (0, 0)),    # b2
            pl.BlockSpec((1, H), lambda i: (0, 0)),    # w3 row (output-layer weight)
            pl.BlockSpec(memory_space=pltpu.MemorySpace.SMEM),  # b3 scalar
        ],
        out_specs=pl.BlockSpec((1, tb), lambda i: (0, i)),      # lane-dense output row
        compiler_params=pltpu.CompilerParams(
            dimension_semantics=("parallel",),
            vmem_limit_bytes=vmem_limit,
        ),
    )(x, w1, b1, w2, b2, w3, b3)

    return out.reshape(B_pad)[:B].reshape(B, 1)


def init_params(key, input_size, hidden_size):
    """Deterministic init mirroring torch.nn.Linear's U(-1/sqrt(fan_in), +1/sqrt(fan_in)).
    W1/W2 stored as (in, out); W3 stored torch-native as (1, hidden); b3 as (1,)."""
    k1, k2, k3, k4, k5, k6 = jax.random.split(key, 6)

    def unif(k, shape, fan_in):
        bound = 1.0 / np.sqrt(fan_in)
        return jax.random.uniform(k, shape, jnp.float32, -bound, bound)

    w1 = unif(k1, (input_size, hidden_size), input_size)
    b1 = unif(k2, (1, hidden_size), input_size)
    w2 = unif(k3, (hidden_size, hidden_size), hidden_size)
    b2 = unif(k4, (1, hidden_size), hidden_size)
    w3 = unif(k5, (1, hidden_size), hidden_size)   # output layer weight (1, H)
    b3 = unif(k6, (1,), hidden_size)               # output layer bias, scalar
    return w1, b1, w2, b2, w3, b3


def reference_forward(x, w1, b1, w2, b2, w3, b3):
    h1 = jnp.maximum(x @ w1 + b1, 0.0)
    h2 = jnp.maximum(h1 @ w2 + b2, 0.0)
    logits = h2 @ w3.T + b3[None, :]               # (B, 1)
    return jax.nn.sigmoid(logits)


if __name__ == "__main__":
    key = jax.random.PRNGKey(0)
    kx, kp = jax.random.split(key)

    batch = 8
    input_size = 32
    hidden_size = 32

    x = jax.random.normal(kx, (batch, input_size), jnp.float32)
    params = init_params(kp, input_size, hidden_size)

    out = binary_classification_forward(x, *params)
    out = jax.block_until_ready(out)

    ref = reference_forward(x, *params)
    assert out.shape == (batch, 1)
    np.testing.assert_allclose(np.asarray(out), np.asarray(ref), rtol=1e-5, atol=1e-5)

    print("KERNEL_OK")
</pallas_src>

<mosaic_0001>
module attributes {stable_mosaic.version = 11 : i64} {
  func.func @mlp_kernel(%arg0: i32, %arg1: memref<8x32xf32, #tpu.memory_space<vmem>>, %arg2: memref<32x32xf32, #tpu.memory_space<vmem>>, %arg3: memref<1x32xf32, #tpu.memory_space<vmem>>, %arg4: memref<32x32xf32, #tpu.memory_space<vmem>>, %arg5: memref<1x32xf32, #tpu.memory_space<vmem>>, %arg6: memref<1x32xf32, #tpu.memory_space<vmem>>, %arg7: memref<1xf32, #tpu.memory_space<smem>>, %arg8: memref<1x8xf32, #tpu.memory_space<vmem>>) attributes {dimension_semantics = [#tpu.dimension_semantics<parallel>], iteration_bounds = array<i64: 1>, scalar_prefetch = 0 : i64, scratch_operands = 0 : i64, tpu.core_type = #tpu.core_type<tc>, window_params = [{transform_indices = @transform_0, window_bounds = array<i64: 8, 32>}, {pipeline_mode = #tpu.pipeline_mode<synchronous>, transform_indices = @transform_1, window_bounds = array<i64: 32, 32>}, {pipeline_mode = #tpu.pipeline_mode<synchronous>, transform_indices = @transform_2, window_bounds = array<i64: 1, 32>}, {pipeline_mode = #tpu.pipeline_mode<synchronous>, transform_indices = @transform_3, window_bounds = array<i64: 32, 32>}, {pipeline_mode = #tpu.pipeline_mode<synchronous>, transform_indices = @transform_4, window_bounds = array<i64: 1, 32>}, {pipeline_mode = #tpu.pipeline_mode<synchronous>, transform_indices = @transform_5, window_bounds = array<i64: 1, 32>}, {transform_indices = @transform_6, window_bounds = array<i64: 1>}, {transform_indices = @transform_7, window_bounds = array<i64: 1, 8>}]} {
    %c0 = arith.constant 0 : index
    %c0_0 = arith.constant 0 : index
    %0 = vector.load %arg1[%c0, %c0_0] : memref<8x32xf32, #tpu.memory_space<vmem>>, vector<8x32xf32>
    %c0_1 = arith.constant 0 : index
    %c0_2 = arith.constant 0 : index
    %1 = vector.load %arg2[%c0_1, %c0_2] : memref<32x32xf32, #tpu.memory_space<vmem>>, vector<32x32xf32>
    %cst = arith.constant dense<0.000000e+00> : vector<8x32xf32>
    %2 = tpu.matmul %0, %1, %cst {dimension_numbers = #tpu.dot_dimension_numbers<[1], [0], [0], [1], [0, 0, 1, 1], [], []>} : vector<8x32xf32>, vector<32x32xf32>, vector<8x32xf32> -> vector<8x32xf32>
    %c0_3 = arith.constant 0 : index
    %c0_4 = arith.constant 0 : index
    %3 = vector.load %arg3[%c0_3, %c0_4] : memref<1x32xf32, #tpu.memory_space<vmem>>, vector<1x32xf32>
    %4 = vector.broadcast %3 : vector<1x32xf32> to vector<8x32xf32>
    %5 = arith.addf %2, %4 : vector<8x32xf32>
    %cst_5 = arith.constant 0.000000e+00 : f32
    %6 = vector.broadcast %cst_5 : f32 to vector<8x32xf32>
    %7 = arith.maximumf %5, %6 : vector<8x32xf32>
    %c0_6 = arith.constant 0 : index
    %c0_7 = arith.constant 0 : index
    %8 = vector.load %arg4[%c0_6, %c0_7] : memref<32x32xf32, #tpu.memory_space<vmem>>, vector<32x32xf32>
    %cst_8 = arith.constant dense<0.000000e+00> : vector<8x32xf32>
    %9 = tpu.matmul %7, %8, %cst_8 {dimension_numbers = #tpu.dot_dimension_numbers<[1], [0], [0], [1], [0, 0, 1, 1], [], []>} : vector<8x32xf32>, vector<32x32xf32>, vector<8x32xf32> -> vector<8x32xf32>
    %c0_9 = arith.constant 0 : index
    %c0_10 = arith.constant 0 : index
    %10 = vector.load %arg5[%c0_9, %c0_10] : memref<1x32xf32, #tpu.memory_space<vmem>>, vector<1x32xf32>
    %11 = vector.broadcast %10 : vector<1x32xf32> to vector<8x32xf32>
    %12 = arith.addf %9, %11 : vector<8x32xf32>
    %cst_11 = arith.constant 0.000000e+00 : f32
    %13 = vector.broadcast %cst_11 : f32 to vector<8x32xf32>
    %14 = arith.maximumf %12, %13 : vector<8x32xf32>
    %c0_12 = arith.constant 0 : index
    %c0_13 = arith.constant 0 : index
    %15 = vector.load %arg6[%c0_12, %c0_13] : memref<1x32xf32, #tpu.memory_space<vmem>>, vector<1x32xf32>
    %16 = vector.broadcast %15 : vector<1x32xf32> to vector<8x32xf32>
    %17 = arith.mulf %14, %16 : vector<8x32xf32>
    %cst_14 = arith.constant dense<0.000000e+00> : vector<8xf32>
    %18 = vector.multi_reduction <add>, %17, %cst_14 [1] : vector<8x32xf32> to vector<8xf32>
    %c0_15 = arith.constant 0 : index
    %19 = memref.load %arg7[%c0_15] : memref<1xf32, #tpu.memory_space<smem>>
    %20 = vector.broadcast %19 : f32 to vector<8xf32>
    %21 = arith.addf %18, %20 : vector<8xf32>
    %22 = arith.negf %21 : vector<8xf32>
    %23 = math.exp %22 : vector<8xf32>
    %cst_16 = arith.constant 1.000000e+00 : f32
    %24 = vector.broadcast %cst_16 : f32 to vector<8xf32>
    %25 = arith.addf %24, %23 : vector<8xf32>
    %26 = arith.divf %24, %25 : vector<8xf32>
    %27 = vector.shape_cast %26 : vector<8xf32> to vector<1x8xf32>
    %c0_17 = arith.constant 0 : index
    %c0_18 = arith.constant 0 : index
    %28 = vector.load %arg8[%c0_17, %c0_18] : memref<1x8xf32, #tpu.memory_space<vmem>>, vector<1x8xf32>
    tpu.vector_store %arg8[%c0_17, %c0_18], %27 {strides = array<i32>} : memref<1x8xf32, #tpu.memory_space<vmem>>, vector<1x8xf32>,
    return
  }
  func.func @transform_0(%arg0: i32) -> (i32, i32) {
    %c0_i32 = arith.constant 0 : i32
    %c0_i32_0 = arith.constant 0 : i32
    return %arg0, %c0_i32 : i32, i32
  }
  func.func @transform_1(%arg0: i32) -> (i32, i32) {
    %c0_i32 = arith.constant 0 : i32
    %c0_i32_0 = arith.constant 0 : i32
    %c0_i32_1 = arith.constant 0 : i32
    return %c0_i32, %c0_i32_0 : i32, i32
  }
  func.func @transform_2(%arg0: i32) -> (i32, i32) {
    %c0_i32 = arith.constant 0 : i32
    %c0_i32_0 = arith.constant 0 : i32
    %c0_i32_1 = arith.constant 0 : i32
    return %c0_i32, %c0_i32_0 : i32, i32
  }
  func.func @transform_3(%arg0: i32) -> (i32, i32) {
    %c0_i32 = arith.constant 0 : i32
    %c0_i32_0 = arith.constant 0 : i32
    %c0_i32_1 = arith.constant 0 : i32
    return %c0_i32, %c0_i32_0 : i32, i32
  }
  func.func @transform_4(%arg0: i32) -> (i32, i32) {
    %c0_i32 = arith.constant 0 : i32
    %c0_i32_0 = arith.constant 0 : i32
    %c0_i32_1 = arith.constant 0 : i32
    return %c0_i32, %c0_i32_0 : i32, i32
  }
  func.func @transform_5(%arg0: i32) -> (i32, i32) {
    %c0_i32 = arith.constant 0 : i32
    %c0_i32_0 = arith.constant 0 : i32
    %c0_i32_1 = arith.constant 0 : i32
    return %c0_i32, %c0_i32_0 : i32, i32
  }
  func.func @transform_6(%arg0: i32) -> i32 {
    %c0_i32 = arith.constant 0 : i32
    %c0_i32_0 = arith.constant 0 : i32
    return %c0_i32 : i32
  }
  func.func @transform_7(%arg0: i32) -> (i32, i32) {
    %c0_i32 = arith.constant 0 : i32
    %c0_i32_0 = arith.constant 0 : i32
    return %c0_i32, %arg0 : i32, i32
  }
}

</mosaic_0001>

<llo_original>
// kernel: tpu_custom_call.1
$region0: #{tpu_custom_call.1}
  #allocation0 [shape = 'u32[]', space=smem, size = 0x4, offset = 0x4, fixed_abs, tag = 'smem constant byte address 0x4 - core index']
  #allocation1 [shape = 'u32[72,128]{1,0:T(1,128)}', space=vmem, size = 0x9000, scoped, tag = 'internal scratch']
  #allocation2 [shape = 'f32[1]{0:T(128)S(6)}', space=smem, size = 0x200, scoped, tag = 'scoped memory for tpu_custom_call.1']
  %s0 = inlined_call_operand.hbm [shape: f32[8,32], index: 0, kind: input, shape index: {}]
  %s1 = inlined_call_operand.hbm [shape: f32[32,32], index: 1, kind: input, shape index: {}]
  %s2 = inlined_call_operand.vmem [shape: f32[1,32], index: 2, kind: input, shape index: {}]
  %s3 = inlined_call_operand.hbm [shape: f32[32,32], index: 3, kind: input, shape index: {}]
  %s4 = inlined_call_operand.vmem [shape: f32[1,32], index: 4, kind: input, shape index: {}]
  %s5 = inlined_call_operand.vmem [shape: f32[1,32], index: 5, kind: input, shape index: {}]
  %s6 = inlined_call_operand.<no memory space> [shape: f32[1], index: 6, kind: input, shape index: {}]
  %s7 = inlined_call_operand.hbm [shape: f32[1,8], index: 7, kind: output, shape index: {}]
  %s8 = sld [smem:[#allocation0]]
  $region50: #{tpu_custom_call.1} parent=0
    _
  %s10 = ssub.s32 1, %s8
  %s11 = scalar_select 0, %s10, %s8
  %12 = sst [smem:[#allocation2]] %s6
  $region1: #{tpu_custom_call.1} parent=0
    #allocation3 [shape = 'u8[4096]{0}', space=vmem, size = 0x1000, scoped, tag = 'input window, operand 0, single buffered']
    #allocation4 [shape = 's32[1]{0}', space=sflag, size = 0x4, scoped, tag = 'scoped memory for tpu_custom_call.1']
    #allocation5 [shape = 's32[1]{0}', space=sflag, size = 0x4, scoped, tag = 'scoped memory for tpu_custom_call.1']
    #allocation6 [shape = 'u8[16384]{0}', space=vmem, size = 0x4000, scoped, tag = 'input window, operand 1, single buffered']
    #allocation7 [shape = 's32[1]{0}', space=sflag, size = 0x4, scoped, tag = 'scoped memory for tpu_custom_call.1']
    #allocation8 [shape = 'u8[16384]{0}', space=vmem, size = 0x4000, scoped, tag = 'input window, operand 3, single buffered']
    #allocation9 [shape = 'u8[512]{0}', space=vmem, size = 0x400, scoped, tag = 'output window, operand 0, single buffered']
    %13 = vsyncpa [#allocation4], 0
    %14 = vsyncpa [#allocation7], 0
    %15 = vsyncpa [#allocation5], 0
    // Predicated region
    $region2: #{tpu_custom_call.1} parent=1 // pred_check
      _
    $region3: #{tpu_custom_call.1} parent=1 // pred_check_branch
      %17 = sbr.rel (0) target = $region5
    $region4: #{tpu_custom_call.1} parent=1 // pred_region
      %19 = vsyncadd [#allocation4], 0
      %s21 = sshll.u32 %s0, 4
      %s22 = int_to_ptr.hbm [resolvable:$true] %s21
      %s23 = sshll.u32 [#allocation3], 4
      %s24 = int_to_ptr.vmem [resolvable:$true] %s23
      %26 = dma.hbm_to_vmem [thread:$0]  %s22, 128, %s24, [#allocation4]
    $region5: #{tpu_custom_call.1} parent=1 // pred_fallthru
      _
    // Predicated region
    $region6: #{tpu_custom_call.1} parent=1 // pred_check
      _
    $region7: #{tpu_custom_call.1} parent=1 // pred_check_branch
      %28 = sbr.rel (0) target = $region9
    $region8: #{tpu_custom_call.1} parent=1 // pred_region
      %30 = vsyncadd [#allocation7], 0
      %s31 = sshll.u32 %s1, 4
      %s32 = int_to_ptr.hbm [resolvable:$true] %s31
      %s33 = sshll.u32 [#allocation6], 4
      %s34 = int_to_ptr.vmem [resolvable:$true] %s33
      %39 = dma.hbm_to_vmem [thread:$0]  %s32, 512, %s34, [#allocation7], 128, 128, 8
    $region9: #{tpu_custom_call.1} parent=1 // pred_fallthru
      _
    // Predicated region
    $region10: #{tpu_custom_call.1} parent=1 // pred_check
      _
    $region11: #{tpu_custom_call.1} parent=1 // pred_check_branch
      %41 = sbr.rel (0) target = $region13
    $region12: #{tpu_custom_call.1} parent=1 // pred_region
      _
    $region13: #{tpu_custom_call.1} parent=1 // pred_fallthru
      _
    // Predicated region
    $region14: #{tpu_custom_call.1} parent=1 // pred_check
      _
    $region15: #{tpu_custom_call.1} parent=1 // pred_check_branch
      %43 = sbr.rel (0) target = $region17
    $region16: #{tpu_custom_call.1} parent=1 // pred_region
      %45 = vsyncadd [#allocation7], 0
      %s46 = sshll.u32 %s3, 4
      %s47 = int_to_ptr.hbm [resolvable:$true] %s46
      %s48 = sshll.u32 [#allocation8], 4
      %s49 = int_to_ptr.vmem [resolvable:$true] %s48
      %54 = dma.hbm_to_vmem [thread:$0]  %s47, 512, %s49, [#allocation7], 128, 128, 8
    $region17: #{tpu_custom_call.1} parent=1 // pred_fallthru
      _
    // Predicated region
    $region18: #{tpu_custom_call.1} parent=1 // pred_check
      _
    $region19: #{tpu_custom_call.1} parent=1 // pred_check_branch
      %56 = sbr.rel (0) target = $region21
    $region20: #{tpu_custom_call.1} parent=1 // pred_region
      _
    $region21: #{tpu_custom_call.1} parent=1 // pred_fallthru
      _
    // Predicated region
    $region22: #{tpu_custom_call.1} parent=1 // pred_check
      _
    $region23: #{tpu_custom_call.1} parent=1 // pred_check_branch
      %58 = sbr.rel (0) target = $region25
    $region24: #{tpu_custom_call.1} parent=1 // pred_region
      _
    $region25: #{tpu_custom_call.1} parent=1 // pred_fallthru
      _
    // Predicated region
    $region26: #{tpu_custom_call.1} parent=1 // pred_check
      _
    $region27: #{tpu_custom_call.1} parent=1 // pred_check_branch
      %60 = sbr.rel (0) target = $region29
    $region28: #{tpu_custom_call.1} parent=1 // pred_region
      _
    $region29: #{tpu_custom_call.1} parent=1 // pred_fallthru
      _
    // Predicated region
    $region30: #{tpu_custom_call.1} parent=1 // pred_check
      _
    $region31: #{tpu_custom_call.1} parent=1 // pred_check_branch
      %62 = sbr.rel (0) target = $region33
    $region32: #{tpu_custom_call.1} parent=1 // pred_region
      %64 = dma.done [#allocation4], 128
    $region33: #{tpu_custom_call.1} parent=1 // pred_fallthru
      _
    // Predicated region
    $region34: #{tpu_custom_call.1} parent=1 // pred_check
      _
    $region35: #{tpu_custom_call.1} parent=1 // pred_check_branch
      %66 = sbr.rel (0) target = $region37
    $region36: #{tpu_custom_call.1} parent=1 // pred_region
      %68 = dma.done [#allocation7], 512
    $region37: #{tpu_custom_call.1} parent=1 // pred_fallthru
      _
    // Predicated region
    $region38: #{tpu_custom_call.1} parent=1 // pred_check
      _
    $region39: #{tpu_custom_call.1} parent=1 // pred_check_branch
      %70 = sbr.rel (0) target = $region41
    $region40: #{tpu_custom_call.1} parent=1 // pred_region
      %72 = dma.done [#allocation7], 512
    $region41: #{tpu_custom_call.1} parent=1 // pred_fallthru
      _
    %v73 = vld [vmem:[#allocation3] sm:$0xff]
    %v74 = vld [vmem:[#allocation6] sm:$0xff]
    %v75 = vld [vmem:[#allocation6 + $0x8] sm:$0xff]
    %v76 = vld [vmem:[#allocation6 + $0x10] sm:$0xff]
    %v77 = vld [vmem:[#allocation6 + $0x18] sm:$0xff]
    %v78 = vld [vmem:[%s2] sm:$0x1]
    %v80 = vperm.slane %v78, 0
    %vm82 = vcmask 261120
    %v84 = vsel %vm82, %v73, 0
    %86 = vmatpush.msra.mxu0 0.0
    %87 = vmatpush.msra.mxu0 0.0
    %88 = vmatpush.msra.mxu0 0.0
    %89 = vmatpush.msra.mxu0 0.0
    %90 = vmatpush.msra.mxu0 0.0
    %91 = vmatpush.msra.mxu0 0.0
    %92 = vmatpush.msra.mxu0 0.0
    %93 = vmatpush.msra.mxu0 0.0
    %94 = vmatpush.msra.mxu0 0.0
    %95 = vmatpush.msra.mxu0 0.0
    %96 = vmatpush.msra.mxu0 0.0
    %97 = vmatpush.msra.mxu0 0.0
    %98 = vmatpush.msra.mxu0 %v77
    %99 = vmatpush.msra.mxu0 %v76
    %100 = vmatpush.msra.mxu0 %v75
    %101 = vmatpush.msra.mxu0 %v74
    %102 = vmatmul.f32.gmra.mxu0 %v84
    %v103 = vpop.f32.mrf.mxu0
    %v104 = vadd.f32 %v80, %v103
    %105 = vdwg.mxu0
    %v106 = vmax.f32 %v104, 0.0
    %v107 = vld [vmem:[#allocation8] sm:$0xff]
    %v108 = vld [vmem:[#allocation8 + $0x8] sm:$0xff]
    %v109 = vld [vmem:[#allocation8 + $0x10] sm:$0xff]
    %v110 = vld [vmem:[#allocation8 + $0x18] sm:$0xff]
    %v111 = vld [vmem:[%s4] sm:$0x1]
    %v113 = vperm.slane %v111, 0
    %v116 = vsel %vm82, %v106, 0
    %118 = vmatpush.msra.mxu0 0.0
    %119 = vmatpush.msra.mxu0 0.0
    %120 = vmatpush.msra.mxu0 0.0
    %121 = vmatpush.msra.mxu0 0.0
    %122 = vmatpush.msra.mxu0 0.0
    %123 = vmatpush.msra.mxu0 0.0
    %124 = vmatpush.msra.mxu0 0.0
    %125 = vmatpush.msra.mxu0 0.0
    %126 = vmatpush.msra.mxu0 0.0
    %127 = vmatpush.msra.mxu0 0.0
    %128 = vmatpush.msra.mxu0 0.0
    %129 = vmatpush.msra.mxu0 0.0
    %130 = vmatpush.msra.mxu0 %v110
    %131 = vmatpush.msra.mxu0 %v109
    %132 = vmatpush.msra.mxu0 %v108
    %133 = vmatpush.msra.mxu0 %v107
    %134 = vmatmul.f32.gmra.mxu0 %v116
    %v135 = vpop.f32.mrf.mxu0
    %v136 = vadd.f32 %v113, %v135
    %137 = vdwg.mxu0
    %v138 = vmax.f32 %v136, 0.0
    %v139 = vld [vmem:[%s5] sm:$0x1]
    %v141 = vperm.slane %v139, 0
    %v143 = vmul.f32 %v138, %v141
    %v144 = vsel %vm82, %v143, 0.0
    %145 = vadd.xlane.f32.xlu0 %v144
    %v146 = vpop.xlane.xlu0 %145
    %s147 = sld [smem:[#allocation2]]
    %v148 = vstv %s147
    %v149 = vadd.f32 %v146, %v148
    %v150 = vxor.u32 %v149, 2147483648
    %v151 = vmul.f32 %v150, 1.442695
    %v152 = vpow.pop %v151
    %v153 = vadd.f32 %v152, 1.0
    %v154 = vrcp.pop %v153
    %v155 = vmul.f32 %v153, %v154
    %v156 = vsub.f32 1.0, %v155
    %v157 = vmul.f32 %v154, %v156
    %v158 = vadd.f32 %v154, %v157
    %vm159 = vweird.f32 %v153
    %vm160 = vweird.f32 %v154
    %vm161 = vmor %vm159, %vm160
    %v162 = vsel %vm161, %v154, %v158
    %v163 = vand.u32 2147483647, %v153
    %vm164 = vcmp.eq.f32.partialorder %v163, 8.507059e+37
    %v165 = vand.u32 %v153, 2147483648
    %v166 = vor.u32 1.1754944e-38, %v165
    %v167 = vsel %vm164, %v166, %v162
    %v168 = vmul.f32 1.0, %v167
    %v170 = vlaneseq
    %v171 = vand.u32 %v170, 127
    %v172 = vperm.slane %v168, %v171
    %vm174 = vcmask 57344
    %175 = vst.msk [vmem:[#allocation9] sm:$0x1] %vm174, %v172
    // Predicated region
    $region42: #{tpu_custom_call.1} parent=1 // pred_check
      _
    $region43: #{tpu_custom_call.1} parent=1 // pred_check_branch
      %177 = sbr.rel (0) target = $region45
    $region44: #{tpu_custom_call.1} parent=1 // pred_region
      %179 = vsyncadd [#allocation5], 0
      %s181 = sshll.u32 [#allocation9], 4
      %s182 = int_to_ptr.vmem [resolvable:$true] %s181
      %s183 = sshll.u32 %s7, 4
      %s184 = int_to_ptr.hbm [resolvable:$true] %s183
      %186 = dma.vmem_to_hbm [thread:$0]  %s182, 16, %s184, [#allocation5]
    $region45: #{tpu_custom_call.1} parent=1 // pred_fallthru
      _
    // Predicated region
    $region46: #{tpu_custom_call.1} parent=1 // pred_check
      _
    $region47: #{tpu_custom_call.1} parent=1 // pred_check_branch
      %188 = sbr.rel (0) target = $region49
    $region48: #{tpu_custom_call.1} parent=1 // pred_region
      %190 = dma.done [#allocation5], 16
    $region49: #{tpu_custom_call.1} parent=1 // pred_fallthru
      _
    %191 = vsyncpa [#allocation4], 1
    %192 = vsyncpa [#allocation7], 1
    %193 = vsyncpa [#allocation5], 1

</llo_original>
